<compile_context>
chip_gen: v7x
topology: tpu7x:2x2x1
jax: 0.10.0
libtpu: 0.0.40
codegen_flags: <defaults>
</compile_context>

<pallas_src>
import jax
import jax.numpy as jnp
from jax.experimental import pallas as pl
from jax.experimental.pallas import tpu as pltpu


def add_conv1x1_kernel(a_ref, b_ref, w_ref, o_ref):
    # Elementwise add in f32 (VPU), cast to bf16 for a single MXU pass,
    # accumulate in f32.
    s = (a_ref[...] + b_ref[...]).astype(jnp.bfloat16)               # (Cin, Mp)
    o_ref[...] = jnp.dot(w_ref[...], s,                              # (tCout, Mp)
                         preferred_element_type=jnp.float32)


def _default_cout_tile(cout):
    # v7x has 2 TensorCores per chip: give the parallel grid axis 2 steps so
    # dimension_semantics=("parallel",) can shard them. Single-TC chips
    # (v5e/v6e) get a single grid step (no serial-loop overhead).
    try:
        kind = jax.devices()[0].device_kind.lower()
        if "v7" in kind and cout % 2 == 0:
            return cout // 2
    except Exception:
        pass
    return cout


def add_conv1x1(x142, x127, weight, *, cout_tile=None):
    """x142, x127: NCHW float32 [1, Cin, H, W]; weight: [Cout, Cin, 1, 1]."""
    N, Cin, H, W = x142.shape
    Cout = weight.shape[0]
    M = H * W
    # NCHW-native flat reshape relies on N == 1 (pure metadata reshape).
    assert N == 1, "kernel layout assumes batch size 1 (as in the module spec)"

    if cout_tile is None:
        cout_tile = _default_cout_tile(Cout)
    assert Cout % cout_tile == 0

    # Lane-dense padded spatial width (196 -> 256): unmasked vector stores.
    Mp = ((M + 127) // 128) * 128

    a = x142.reshape(Cin, M)                      # (128, 196), no transpose
    b = x127.reshape(Cin, M)                      # (128, 196), no transpose
    if Mp != M:
        pad = ((0, 0), (0, Mp - M))
        a = jnp.pad(a, pad)                       # (128, 256)
        b = jnp.pad(b, pad)
    # Pre-cast the weight to bf16 once in the wrapper (halves W DMA).
    w = weight.reshape(Cout, Cin).astype(jnp.bfloat16)   # (512, 128)

    cost = pl.CostEstimate(
        flops=2 * Mp * Cin * Cout,
        transcendentals=0,
        bytes_accessed=(2 * Mp * Cin * 4) + (Cin * Cout * 2) + (Mp * Cout * 4),
    )

    out_flat = pl.pallas_call(
        add_conv1x1_kernel,
        out_shape=jax.ShapeDtypeStruct((Cout, Mp), jnp.float32),
        grid_spec=pl.GridSpec(
            grid=(Cout // cout_tile,),
            in_specs=[
                # A, B: constant block index -> stay VMEM-resident across grid.
                pl.BlockSpec((Cin, Mp), lambda j: (0, 0)),
                pl.BlockSpec((Cin, Mp), lambda j: (0, 0)),
                # W: tiled over Cout (single tile on v5e/v6e, 2 tiles on v7x).
                pl.BlockSpec((cout_tile, Cin), lambda j: (j, 0)),
            ],
            out_specs=pl.BlockSpec((cout_tile, Mp), lambda j: (j, 0)),
        ),
        compiler_params=pltpu.CompilerParams(
            dimension_semantics=("parallel",),
        ),
        cost_estimate=cost,
    )(a, b, w)

    # Drop lane padding, then pure-metadata reshape back to NCHW (N == 1).
    return out_flat[:, :M].reshape(N, Cout, H, W)


if __name__ == "__main__":
    key = jax.random.PRNGKey(0)
    k1, k2, k3 = jax.random.split(key, 3)

    N, Cin, H, W = 1, 128, 14, 14
    Cout = 512

    x142 = jax.random.normal(k1, (N, Cin, H, W), dtype=jnp.float32)
    x127 = jax.random.normal(k2, (N, Cin, H, W), dtype=jnp.float32)
    # Deterministic conv weight init (Conv2d(128, 512, 1, bias=False)).
    weight = jax.random.normal(k3, (Cout, Cin, 1, 1), dtype=jnp.float32) * 0.05

    out = add_conv1x1(x142, x127, weight)
    out = jax.block_until_ready(out)

    # Reference check against XLA conv on the same fused input (f32).
    ref = jax.lax.conv_general_dilated(
        x142 + x127, weight, window_strides=(1, 1), padding="VALID",
        dimension_numbers=("NCHW", "OIHW", "NCHW"))
    assert out.shape == (N, Cout, H, W), out.shape
    # bf16 MXU operands with f32 accumulation: loosened tolerance.
    assert jnp.allclose(out, ref, atol=5e-2, rtol=5e-2)

    print("KERNEL_OK")
</pallas_src>

<mosaic_0001>
module attributes {stable_mosaic.version = 11 : i64} {
  func.func @add_conv1x1_kernel(%arg0: i32, %arg1: memref<128x256xf32, #tpu.memory_space<vmem>>, %arg2: memref<128x256xf32, #tpu.memory_space<vmem>>, %arg3: memref<512x128xbf16, #tpu.memory_space<vmem>>, %arg4: memref<512x256xf32, #tpu.memory_space<vmem>>) attributes {dimension_semantics = [#tpu.dimension_semantics<parallel>], iteration_bounds = array<i64: 1>, scalar_prefetch = 0 : i64, scratch_operands = 0 : i64, tpu.core_type = #tpu.core_type<tc>, window_params = [{pipeline_mode = #tpu.pipeline_mode<synchronous>, transform_indices = @transform_0, window_bounds = array<i64: 128, 256>}, {pipeline_mode = #tpu.pipeline_mode<synchronous>, transform_indices = @transform_1, window_bounds = array<i64: 128, 256>}, {transform_indices = @transform_2, window_bounds = array<i64: 512, 128>}, {transform_indices = @transform_3, window_bounds = array<i64: 512, 256>}]} {
    %c0 = arith.constant 0 : index
    %c0_0 = arith.constant 0 : index
    %0 = vector.load %arg1[%c0, %c0_0] : memref<128x256xf32, #tpu.memory_space<vmem>>, vector<128x256xf32>
    %c0_1 = arith.constant 0 : index
    %c0_2 = arith.constant 0 : index
    %1 = vector.load %arg2[%c0_1, %c0_2] : memref<128x256xf32, #tpu.memory_space<vmem>>, vector<128x256xf32>
    %2 = arith.addf %0, %1 : vector<128x256xf32>
    %3 = arith.truncf %2 : vector<128x256xf32> to vector<128x256xbf16>
    %c0_3 = arith.constant 0 : index
    %c0_4 = arith.constant 0 : index
    %4 = vector.load %arg3[%c0_3, %c0_4] : memref<512x128xbf16, #tpu.memory_space<vmem>>, vector<512x128xbf16>
    %cst = arith.constant dense<0.000000e+00> : vector<512x256xf32>
    %5 = tpu.matmul %4, %3, %cst {dimension_numbers = #tpu.dot_dimension_numbers<[1], [0], [0], [1], [0, 0, 1, 1], [], []>} : vector<512x128xbf16>, vector<128x256xbf16>, vector<512x256xf32> -> vector<512x256xf32>
    %c0_5 = arith.constant 0 : index
    %c0_6 = arith.constant 0 : index
    %6 = vector.load %arg4[%c0_5, %c0_6] : memref<512x256xf32, #tpu.memory_space<vmem>>, vector<512x256xf32>
    tpu.vector_store %arg4[%c0_5, %c0_6], %5 {strides = array<i32>} : memref<512x256xf32, #tpu.memory_space<vmem>>, vector<512x256xf32>,
    return
  }
  func.func @transform_0(%arg0: i32) -> (i32, i32) {
    %c0_i32 = arith.constant 0 : i32
    %c0_i32_0 = arith.constant 0 : i32
    %c0_i32_1 = arith.constant 0 : i32
    return %c0_i32, %c0_i32_0 : i32, i32
  }
  func.func @transform_1(%arg0: i32) -> (i32, i32) {
    %c0_i32 = arith.constant 0 : i32
    %c0_i32_0 = arith.constant 0 : i32
    %c0_i32_1 = arith.constant 0 : i32
    return %c0_i32, %c0_i32_0 : i32, i32
  }
  func.func @transform_2(%arg0: i32) -> (i32, i32) {
    %c0_i32 = arith.constant 0 : i32
    %c0_i32_0 = arith.constant 0 : i32
    return %arg0, %c0_i32 : i32, i32
  }
  func.func @transform_3(%arg0: i32) -> (i32, i32) {
    %c0_i32 = arith.constant 0 : i32
    %c0_i32_0 = arith.constant 0 : i32
    return %arg0, %c0_i32 : i32, i32
  }
}

</mosaic_0001>

<llo_original>
// kernel: tpu_custom_call.1
$region0: #{tpu_custom_call.1}
  #allocation0 [shape = 'u32[]', space=smem, size = 0x4, offset = 0x4, fixed_abs, tag = 'smem constant byte address 0x4 - core index']
  #allocation1 [shape = 'u32[144,128]{1,0:T(1,128)}', space=vmem, size = 0x12000, scoped, tag = 'internal scratch']
  %s0 = inlined_call_operand.hbm [shape: f32[128,256], index: 0, kind: input, shape index: {}]
  %s1 = inlined_call_operand.hbm [shape: f32[128,256], index: 1, kind: input, shape index: {}]
  %s2 = inlined_call_operand.hbm [shape: bf16[512,128], index: 2, kind: input, shape index: {}]
  %s3 = inlined_call_operand.hbm [shape: f32[512,256], index: 3, kind: output, shape index: {}]
  %s4 = sld [smem:[#allocation0]]
  $region34: #{tpu_custom_call.1} parent=0
    _
  %s6 = ssub.s32 1, %s4
  %s7 = scalar_select 0, %s6, %s4
  $region1: #{tpu_custom_call.1} parent=0
    #allocation2 [shape = 'u8[131072]{0}', space=vmem, size = 0x20000, scoped, tag = 'input window, operand 0, single buffered']
    #allocation3 [shape = 's32[1]{0}', space=sflag, size = 0x4, scoped, tag = 'scoped memory for tpu_custom_call.1']
    #allocation4 [shape = 's32[1]{0}', space=sflag, size = 0x4, scoped, tag = 'scoped memory for tpu_custom_call.1']
    #allocation5 [shape = 'u8[131072]{0}', space=vmem, size = 0x20000, scoped, tag = 'input window, operand 1, single buffered']
    #allocation6 [shape = 's32[1]{0}', space=sflag, size = 0x4, scoped, tag = 'scoped memory for tpu_custom_call.1']
    #allocation7 [shape = 'u8[131072]{0}', space=vmem, size = 0x20000, scoped, tag = 'input window, operand 2, single buffered']
    #allocation8 [shape = 'u8[524288]{0}', space=vmem, size = 0x80000, scoped, tag = 'output window, operand 0, single buffered']
    %8 = vsyncpa [#allocation3], 0
    %9 = vsyncpa [#allocation6], 0
    %10 = vsyncpa [#allocation4], 0
    // Predicated region
    $region2: #{tpu_custom_call.1} parent=1 // pred_check
      _
    $region3: #{tpu_custom_call.1} parent=1 // pred_check_branch
      %12 = sbr.rel (0) target = $region5
    $region4: #{tpu_custom_call.1} parent=1 // pred_region
      %s14 = ssub.s32 4096, 4096
      %15 = vsyncadd [#allocation3], %s14
      %s16 = sshll.u32 [#allocation2], 4
      %s17 = int_to_ptr.vmem [resolvable:$true] %s16
      %22 = dma.hbm_to_vmem [thread:$0]  %s0, 4096, %s17, [#allocation3], 256, 256, 16
    $region5: #{tpu_custom_call.1} parent=1 // pred_fallthru
      _
    // Predicated region
    $region6: #{tpu_custom_call.1} parent=1 // pred_check
      _
    $region7: #{tpu_custom_call.1} parent=1 // pred_check_branch
      %24 = sbr.rel (0) target = $region9
    $region8: #{tpu_custom_call.1} parent=1 // pred_region
      %s26 = ssub.s32 4096, 4096
      %27 = vsyncadd [#allocation6], %s26
      %s28 = sshll.u32 [#allocation5], 4
      %s29 = int_to_ptr.vmem [resolvable:$true] %s28
      %34 = dma.hbm_to_vmem [thread:$0]  %s1, 4096, %s29, [#allocation6], 256, 256, 16
    $region9: #{tpu_custom_call.1} parent=1 // pred_fallthru
      _
    // Predicated region
    $region10: #{tpu_custom_call.1} parent=1 // pred_check
      _
    $region11: #{tpu_custom_call.1} parent=1 // pred_check_branch
      %36 = sbr.rel (0) target = $region13
    $region12: #{tpu_custom_call.1} parent=1 // pred_region
      %s38 = ssub.s32 4096, 4096
      %39 = vsyncadd [#allocation6], %s38
      %s40 = sshll.u32 [#allocation7], 4
      %s41 = int_to_ptr.vmem [resolvable:$true] %s40
      %46 = dma.hbm_to_vmem [thread:$0]  %s2, 4096, %s41, [#allocation6], 64, 64, 4
    $region13: #{tpu_custom_call.1} parent=1 // pred_fallthru
      _
    // Predicated region
    $region14: #{tpu_custom_call.1} parent=1 // pred_check
      _
    $region15: #{tpu_custom_call.1} parent=1 // pred_check_branch
      %48 = sbr.rel (0) target = $region17
    $region16: #{tpu_custom_call.1} parent=1 // pred_region
      %49 = dma.done [#allocation3], 4096
    $region17: #{tpu_custom_call.1} parent=1 // pred_fallthru
      _
    // Predicated region
    $region18: #{tpu_custom_call.1} parent=1 // pred_check
      _
    $region19: #{tpu_custom_call.1} parent=1 // pred_check_branch
      %51 = sbr.rel (0) target = $region21
    $region20: #{tpu_custom_call.1} parent=1 // pred_region
      %52 = dma.done [#allocation6], 4096
    $region21: #{tpu_custom_call.1} parent=1 // pred_fallthru
      _
    // Predicated region
    $region22: #{tpu_custom_call.1} parent=1 // pred_check
      _
    $region23: #{tpu_custom_call.1} parent=1 // pred_check_branch
      %54 = sbr.rel (0) target = $region25
    $region24: #{tpu_custom_call.1} parent=1 // pred_region
      %55 = dma.done [#allocation6], 4096
    $region25: #{tpu_custom_call.1} parent=1 // pred_fallthru
      _
    %v57 = vld [vmem:[#allocation2] sm:$0xff]
    %v58 = vld [vmem:[#allocation2 + $0x8] sm:$0xff]
    %v59 = vld [vmem:[#allocation2 + $0x10] sm:$0xff]
    %v60 = vld [vmem:[#allocation2 + $0x18] sm:$0xff]
    %v61 = vld [vmem:[#allocation2 + $0x20] sm:$0xff]
    %v62 = vld [vmem:[#allocation2 + $0x28] sm:$0xff]
    %v63 = vld [vmem:[#allocation2 + $0x30] sm:$0xff]
    %v64 = vld [vmem:[#allocation2 + $0x38] sm:$0xff]
    %v65 = vld [vmem:[#allocation2 + $0x40] sm:$0xff]
    %v66 = vld [vmem:[#allocation2 + $0x48] sm:$0xff]
    %v67 = vld [vmem:[#allocation2 + $0x50] sm:$0xff]
    %v68 = vld [vmem:[#allocation2 + $0x58] sm:$0xff]
    %v69 = vld [vmem:[#allocation2 + $0x60] sm:$0xff]
    %v70 = vld [vmem:[#allocation2 + $0x68] sm:$0xff]
    %v71 = vld [vmem:[#allocation2 + $0x70] sm:$0xff]
    %v72 = vld [vmem:[#allocation2 + $0x78] sm:$0xff]
    %v73 = vld [vmem:[#allocation2 + $0x80] sm:$0xff]
    %v74 = vld [vmem:[#allocation2 + $0x88] sm:$0xff]
    %v75 = vld [vmem:[#allocation2 + $0x90] sm:$0xff]
    %v76 = vld [vmem:[#allocation2 + $0x98] sm:$0xff]
    %v77 = vld [vmem:[#allocation2 + $0xa0] sm:$0xff]
    %v78 = vld [vmem:[#allocation2 + $0xa8] sm:$0xff]
    %v79 = vld [vmem:[#allocation2 + $0xb0] sm:$0xff]
    %v80 = vld [vmem:[#allocation2 + $0xb8] sm:$0xff]
    %v81 = vld [vmem:[#allocation2 + $0xc0] sm:$0xff]
    %v82 = vld [vmem:[#allocation2 + $0xc8] sm:$0xff]
    %v83 = vld [vmem:[#allocation2 + $0xd0] sm:$0xff]
    %v84 = vld [vmem:[#allocation2 + $0xd8] sm:$0xff]
    %v85 = vld [vmem:[#allocation2 + $0xe0] sm:$0xff]
    %v86 = vld [vmem:[#allocation2 + $0xe8] sm:$0xff]
    %v87 = vld [vmem:[#allocation2 + $0xf0] sm:$0xff]
    %v88 = vld [vmem:[#allocation2 + $0xf8] sm:$0xff]
    %v89 = vld [vmem:[#allocation5] sm:$0xff]
    %v90 = vld [vmem:[#allocation5 + $0x8] sm:$0xff]
    %v91 = vld [vmem:[#allocation5 + $0x10] sm:$0xff]
    %v92 = vld [vmem:[#allocation5 + $0x18] sm:$0xff]
    %v93 = vld [vmem:[#allocation5 + $0x20] sm:$0xff]
    %v94 = vld [vmem:[#allocation5 + $0x28] sm:$0xff]
    %v95 = vld [vmem:[#allocation5 + $0x30] sm:$0xff]
    %v96 = vld [vmem:[#allocation5 + $0x38] sm:$0xff]
    %v97 = vld [vmem:[#allocation5 + $0x40] sm:$0xff]
    %v98 = vld [vmem:[#allocation5 + $0x48] sm:$0xff]
    %v99 = vld [vmem:[#allocation5 + $0x50] sm:$0xff]
    %v100 = vld [vmem:[#allocation5 + $0x58] sm:$0xff]
    %v101 = vld [vmem:[#allocation5 + $0x60] sm:$0xff]
    %v102 = vld [vmem:[#allocation5 + $0x68] sm:$0xff]
    %v103 = vld [vmem:[#allocation5 + $0x70] sm:$0xff]
    %v104 = vld [vmem:[#allocation5 + $0x78] sm:$0xff]
    %v105 = vld [vmem:[#allocation5 + $0x80] sm:$0xff]
    %v106 = vld [vmem:[#allocation5 + $0x88] sm:$0xff]
    %v107 = vld [vmem:[#allocation5 + $0x90] sm:$0xff]
    %v108 = vld [vmem:[#allocation5 + $0x98] sm:$0xff]
    %v109 = vld [vmem:[#allocation5 + $0xa0] sm:$0xff]
    %v110 = vld [vmem:[#allocation5 + $0xa8] sm:$0xff]
    %v111 = vld [vmem:[#allocation5 + $0xb0] sm:$0xff]
    %v112 = vld [vmem:[#allocation5 + $0xb8] sm:$0xff]
    %v113 = vld [vmem:[#allocation5 + $0xc0] sm:$0xff]
    %v114 = vld [vmem:[#allocation5 + $0xc8] sm:$0xff]
    %v115 = vld [vmem:[#allocation5 + $0xd0] sm:$0xff]
    %v116 = vld [vmem:[#allocation5 + $0xd8] sm:$0xff]
    %v117 = vld [vmem:[#allocation5 + $0xe0] sm:$0xff]
    %v118 = vld [vmem:[#allocation5 + $0xe8] sm:$0xff]
    %v119 = vld [vmem:[#allocation5 + $0xf0] sm:$0xff]
    %v120 = vld [vmem:[#allocation5 + $0xf8] sm:$0xff]
    %v121 = vadd.f32 %v57, %v89
    %v122 = vadd.f32 %v58, %v90
    %v123 = vadd.f32 %v59, %v91
    %v124 = vadd.f32 %v60, %v92
    %v125 = vadd.f32 %v61, %v93
    %v126 = vadd.f32 %v62, %v94
    %v127 = vadd.f32 %v63, %v95
    %v128 = vadd.f32 %v64, %v96
    %v129 = vadd.f32 %v65, %v97
    %v130 = vadd.f32 %v66, %v98
    %v131 = vadd.f32 %v67, %v99
    %v132 = vadd.f32 %v68, %v100
    %v133 = vadd.f32 %v69, %v101
    %v134 = vadd.f32 %v70, %v102
    %v135 = vadd.f32 %v71, %v103
    %v136 = vadd.f32 %v72, %v104
    %v137 = vadd.f32 %v73, %v105
    %v138 = vadd.f32 %v74, %v106
    %v139 = vadd.f32 %v75, %v107
    %v140 = vadd.f32 %v76, %v108
    %v141 = vadd.f32 %v77, %v109
    %v142 = vadd.f32 %v78, %v110
    %v143 = vadd.f32 %v79, %v111
    %v144 = vadd.f32 %v80, %v112
    %v145 = vadd.f32 %v81, %v113
    %v146 = vadd.f32 %v82, %v114
    %v147 = vadd.f32 %v83, %v115
    %v148 = vadd.f32 %v84, %v116
    %v149 = vadd.f32 %v85, %v117
    %v150 = vadd.f32 %v86, %v118
    %v151 = vadd.f32 %v87, %v119
    %v152 = vadd.f32 %v88, %v120
    %v153 = vpack.c.bf16 %v123, %v121
    %v154 = vpack.c.bf16 %v124, %v122
    %v155 = vpack.c.bf16 %v127, %v125
    %v156 = vpack.c.bf16 %v128, %v126
    %v157 = vpack.c.bf16 %v131, %v129
    %v158 = vpack.c.bf16 %v132, %v130
    %v159 = vpack.c.bf16 %v135, %v133
    %v160 = vpack.c.bf16 %v136, %v134
    %v161 = vpack.c.bf16 %v139, %v137
    %v162 = vpack.c.bf16 %v140, %v138
    %v163 = vpack.c.bf16 %v143, %v141
    %v164 = vpack.c.bf16 %v144, %v142
    %v165 = vpack.c.bf16 %v147, %v145
    %v166 = vpack.c.bf16 %v148, %v146
    %v167 = vpack.c.bf16 %v151, %v149
    %v168 = vpack.c.bf16 %v152, %v150
    %v169 = vld [vmem:[#allocation7] sm:$0xf]
    %v170 = vld [vmem:[#allocation7 + $0x4] sm:$0xf]
    %v171 = vld [vmem:[#allocation7 + $0x8] sm:$0xf]
    %v172 = vld [vmem:[#allocation7 + $0xc] sm:$0xf]
    %v173 = vld [vmem:[#allocation7 + $0x10] sm:$0xf]
    %v174 = vld [vmem:[#allocation7 + $0x14] sm:$0xf]
    %v175 = vld [vmem:[#allocation7 + $0x18] sm:$0xf]
    %v176 = vld [vmem:[#allocation7 + $0x1c] sm:$0xf]
    %v177 = vld [vmem:[#allocation7 + $0x20] sm:$0xf]
    %v178 = vld [vmem:[#allocation7 + $0x24] sm:$0xf]
    %v179 = vld [vmem:[#allocation7 + $0x28] sm:$0xf]
    %v180 = vld [vmem:[#allocation7 + $0x2c] sm:$0xf]
    %v181 = vld [vmem:[#allocation7 + $0x30] sm:$0xf]
    %v182 = vld [vmem:[#allocation7 + $0x34] sm:$0xf]
    %v183 = vld [vmem:[#allocation7 + $0x38] sm:$0xf]
    %v184 = vld [vmem:[#allocation7 + $0x3c] sm:$0xf]
    %v185 = vld [vmem:[#allocation7 + $0x40] sm:$0xf]
    %v186 = vld [vmem:[#allocation7 + $0x44] sm:$0xf]
    %v187 = vld [vmem:[#allocation7 + $0x48] sm:$0xf]
    %v188 = vld [vmem:[#allocation7 + $0x4c] sm:$0xf]
    %v189 = vld [vmem:[#allocation7 + $0x50] sm:$0xf]
    %v190 = vld [vmem:[#allocation7 + $0x54] sm:$0xf]
    %v191 = vld [vmem:[#allocation7 + $0x58] sm:$0xf]
    %v192 = vld [vmem:[#allocation7 + $0x5c] sm:$0xf]
    %v193 = vld [vmem:[#allocation7 + $0x60] sm:$0xf]
    %v194 = vld [vmem:[#allocation7 + $0x64] sm:$0xf]
    %v195 = vld [vmem:[#allocation7 + $0x68] sm:$0xf]
    %v196 = vld [vmem:[#allocation7 + $0x6c] sm:$0xf]
    %v197 = vld [vmem:[#allocation7 + $0x70] sm:$0xf]
    %v198 = vld [vmem:[#allocation7 + $0x74] sm:$0xf]
    %v199 = vld [vmem:[#allocation7 + $0x78] sm:$0xf]
    %v200 = vld [vmem:[#allocation7 + $0x7c] sm:$0xf]
    %v201 = vld [vmem:[#allocation7 + $0x80] sm:$0xf]
    %v202 = vld [vmem:[#allocation7 + $0x84] sm:$0xf]
    %v203 = vld [vmem:[#allocation7 + $0x88] sm:$0xf]
    %v204 = vld [vmem:[#allocation7 + $0x8c] sm:$0xf]
    %v205 = vld [vmem:[#allocation7 + $0x90] sm:$0xf]
    %v206 = vld [vmem:[#allocation7 + $0x94] sm:$0xf]
    %v207 = vld [vmem:[#allocation7 + $0x98] sm:$0xf]
    %v208 = vld [vmem:[#allocation7 + $0x9c] sm:$0xf]
    %v209 = vld [vmem:[#allocation7 + $0xa0] sm:$0xf]
    %v210 = vld [vmem:[#allocation7 + $0xa4] sm:$0xf]
    %v211 = vld [vmem:[#allocation7 + $0xa8] sm:$0xf]
    %v212 = vld [vmem:[#allocation7 + $0xac] sm:$0xf]
    %v213 = vld [vmem:[#allocation7 + $0xb0] sm:$0xf]
    %v214 = vld [vmem:[#allocation7 + $0xb4] sm:$0xf]
    %v215 = vld [vmem:[#allocation7 + $0xb8] sm:$0xf]
    %v216 = vld [vmem:[#allocation7 + $0xbc] sm:$0xf]
    %v217 = vld [vmem:[#allocation7 + $0xc0] sm:$0xf]
    %v218 = vld [vmem:[#allocation7 + $0xc4] sm:$0xf]
    %v219 = vld [vmem:[#allocation7 + $0xc8] sm:$0xf]
    %v220 = vld [vmem:[#allocation7 + $0xcc] sm:$0xf]
    %v221 = vld [vmem:[#allocation7 + $0xd0] sm:$0xf]
    %v222 = vld [vmem:[#allocation7 + $0xd4] sm:$0xf]
    %v223 = vld [vmem:[#allocation7 + $0xd8] sm:$0xf]
    %v224 = vld [vmem:[#allocation7 + $0xdc] sm:$0xf]
    %v225 = vld [vmem:[#allocation7 + $0xe0] sm:$0xf]
    %v226 = vld [vmem:[#allocation7 + $0xe4] sm:$0xf]
    %v227 = vld [vmem:[#allocation7 + $0xe8] sm:$0xf]
    %v228 = vld [vmem:[#allocation7 + $0xec] sm:$0xf]
    %v229 = vld [vmem:[#allocation7 + $0xf0] sm:$0xf]
    %v230 = vld [vmem:[#allocation7 + $0xf4] sm:$0xf]
    %v231 = vld [vmem:[#allocation7 + $0xf8] sm:$0xf]
    %v232 = vld [vmem:[#allocation7 + $0xfc] sm:$0xf]
    %v297 = vunpack.c.l.b16 %v169
    %v298 = vunpack.c.l.b16 %v170
    %v299 = vunpack.c.l.b16 %v171
    %v300 = vunpack.c.l.b16 %v172
    %v301 = vunpack.c.l.b16 %v173
    %v302 = vunpack.c.l.b16 %v174
    %v303 = vunpack.c.l.b16 %v175
    %v304 = vunpack.c.l.b16 %v176
    %v305 = vunpack.c.l.b16 %v177
    %v306 = vunpack.c.l.b16 %v178
    %v307 = vunpack.c.l.b16 %v179
    %v308 = vunpack.c.l.b16 %v180
    %v309 = vunpack.c.l.b16 %v181
    %v310 = vunpack.c.l.b16 %v182
    %v311 = vunpack.c.l.b16 %v183
    %v312 = vunpack.c.l.b16 %v184
    %v313 = vunpack.c.l.b16 %v185
    %v314 = vunpack.c.l.b16 %v186
    %v315 = vunpack.c.l.b16 %v187
    %v316 = vunpack.c.l.b16 %v188
    %v317 = vunpack.c.l.b16 %v189
    %v318 = vunpack.c.l.b16 %v190
    %v319 = vunpack.c.l.b16 %v191
    %v320 = vunpack.c.l.b16 %v192
    %v321 = vunpack.c.l.b16 %v193
    %v322 = vunpack.c.l.b16 %v194
    %v323 = vunpack.c.l.b16 %v195
    %v324 = vunpack.c.l.b16 %v196
    %v325 = vunpack.c.l.b16 %v197
    %v326 = vunpack.c.l.b16 %v198
    %v327 = vunpack.c.l.b16 %v199
    %v328 = vunpack.c.l.b16 %v200
    %v329 = vunpack.c.l.b16 %v201
    %v330 = vunpack.c.l.b16 %v202
    %v331 = vunpack.c.l.b16 %v203
    %v332 = vunpack.c.l.b16 %v204
    %v333 = vunpack.c.l.b16 %v205
    %v334 = vunpack.c.l.b16 %v206
    %v335 = vunpack.c.l.b16 %v207
    %v336 = vunpack.c.l.b16 %v208
    %v337 = vunpack.c.l.b16 %v209
    %v338 = vunpack.c.l.b16 %v210
    %v339 = vunpack.c.l.b16 %v211
    %v340 = vunpack.c.l.b16 %v212
    %v341 = vunpack.c.l.b16 %v213
    %v342 = vunpack.c.l.b16 %v214
    %v343 = vunpack.c.l.b16 %v215
    %v344 = vunpack.c.l.b16 %v216
    %v345 = vunpack.c.l.b16 %v217
    %v346 = vunpack.c.l.b16 %v218
    %v347 = vunpack.c.l.b16 %v219
    %v348 = vunpack.c.l.b16 %v220
    %v349 = vunpack.c.l.b16 %v221
    %v350 = vunpack.c.l.b16 %v222
    %v351 = vunpack.c.l.b16 %v223
    %v352 = vunpack.c.l.b16 %v224
    %v353 = vunpack.c.l.b16 %v225
    %v354 = vunpack.c.l.b16 %v226
    %v355 = vunpack.c.l.b16 %v227
    %v356 = vunpack.c.l.b16 %v228
    %v357 = vunpack.c.l.b16 %v229
    %v358 = vunpack.c.l.b16 %v230
    %v359 = vunpack.c.l.b16 %v231
    %v360 = vunpack.c.l.b16 %v232
    %v361 = vpack.c.b16 %v298, %v297
    %v362 = vpack.c.b16 %v300, %v299
    %v363 = vpack.c.b16 %v302, %v301
    %v364 = vpack.c.b16 %v304, %v303
    %v365 = vpack.c.b16 %v306, %v305
    %v366 = vpack.c.b16 %v308, %v307
    %v367 = vpack.c.b16 %v310, %v309
    %v368 = vpack.c.b16 %v312, %v311
    %v369 = vpack.c.b16 %v314, %v313
    %v370 = vpack.c.b16 %v316, %v315
    %v371 = vpack.c.b16 %v318, %v317
    %v372 = vpack.c.b16 %v320, %v319
    %v373 = vpack.c.b16 %v322, %v321
    %v374 = vpack.c.b16 %v324, %v323
    %v375 = vpack.c.b16 %v326, %v325
    %v376 = vpack.c.b16 %v328, %v327
    %v377 = vpack.c.b16 %v330, %v329
    %v378 = vpack.c.b16 %v332, %v331
    %v379 = vpack.c.b16 %v334, %v333
    %v380 = vpack.c.b16 %v336, %v335
    %v381 = vpack.c.b16 %v338, %v337
    %v382 = vpack.c.b16 %v340, %v339
    %v383 = vpack.c.b16 %v342, %v341
    %v384 = vpack.c.b16 %v344, %v343
    %v385 = vpack.c.b16 %v346, %v345
    %v386 = vpack.c.b16 %v348, %v347
    %v387 = vpack.c.b16 %v350, %v349
    %v388 = vpack.c.b16 %v352, %v351
    %v389 = vpack.c.b16 %v354, %v353
    %v390 = vpack.c.b16 %v356, %v355
    %v391 = vpack.c.b16 %v358, %v357
    %v392 = vpack.c.b16 %v360, %v359
    %425 = vmatprep.subr.bf16.mxu0 %v154
    %426 = vmatpush1.bf16.msra.mxu0 %v153
    %427 = vmatprep.subr.bf16.mxu0 %v156
    %428 = vmatpush1.bf16.msra.mxu0 %v155
    %429 = vmatprep.subr.bf16.mxu0 %v158
    %430 = vmatpush1.bf16.msra.mxu0 %v157
    %431 = vmatprep.subr.bf16.mxu0 %v160
    %432 = vmatpush1.bf16.msra.mxu0 %v159
    %433 = vmatprep.subr.bf16.mxu0 %v162
    %434 = vmatpush1.bf16.msra.mxu0 %v161
    %435 = vmatprep.subr.bf16.mxu0 %v164
    %436 = vmatpush1.bf16.msra.mxu0 %v163
    %437 = vmatprep.subr.bf16.mxu0 %v166
    %438 = vmatpush1.bf16.msra.mxu0 %v165
    %439 = vmatprep.subr.bf16.mxu0 %v168
    %440 = vmatpush1.bf16.msra.mxu0 %v167
    %441 = vmatprep.subr.bf16.mxu0 0
    %442 = vmatpush1.bf16.msra.mxu0 0
    %443 = vmatprep.subr.bf16.mxu0 0
    %444 = vmatpush1.bf16.msra.mxu0 0
    %445 = vmatprep.subr.bf16.mxu0 0
    %446 = vmatpush1.bf16.msra.mxu0 0
    %447 = vmatprep.subr.bf16.mxu0 0
    %448 = vmatpush1.bf16.msra.mxu0 0
    %449 = vmatprep.subr.bf16.mxu0 0
    %450 = vmatpush1.bf16.msra.mxu0 0
    %451 = vmatprep.subr.bf16.mxu0 0
    %452 = vmatpush1.bf16.msra.mxu0 0
    %453 = vmatprep.subr.bf16.mxu0 0
    %454 = vmatpush1.bf16.msra.mxu0 0
    %455 = vmatprep.subr.bf16.mxu0 0
    %456 = vmatpush1.bf16.msra.mxu0 0
    %457 = vmatprep.mubr.bf16.mxu0 0
    %458 = vmatmul.mubr.bf16.gmra.mrb[0].mxu0 %v361
    %v459 = vpop.f32.mrb[0].mxu0
    %v460 = vadd.f32 0.0, %v459
    %v461 = vpop.f32.mrb[0].mxu0
    %v462 = vadd.f32 0.0, %v461
    %v463 = vpop.f32.mrb[0].mxu0
    %v464 = vadd.f32 0.0, %v463
    %v465 = vpop.f32.mrb[0].mxu0
    %v466 = vadd.f32 0.0, %v465
    %467 = vmatprep.mubr.bf16.mxu0 0
    %468 = vmatmul.mubr.bf16.gmra.mrb[0].mxu0 %v362
    %v469 = vpop.f32.mrb[0].mxu0
    %v470 = vadd.f32 0.0, %v469
    %v471 = vpop.f32.mrb[0].mxu0
    %v472 = vadd.f32 0.0, %v471
    %v473 = vpop.f32.mrb[0].mxu0
    %v474 = vadd.f32 0.0, %v473
    %v475 = vpop.f32.mrb[0].mxu0
    %v476 = vadd.f32 0.0, %v475
    %477 = vmatprep.mubr.bf16.mxu0 0
    %478 = vmatmul.mubr.bf16.gmra.mrb[0].mxu0 %v363
    %v479 = vpop.f32.mrb[0].mxu0
    %v480 = vadd.f32 0.0, %v479
    %v481 = vpop.f32.mrb[0].mxu0
    %v482 = vadd.f32 0.0, %v481
    %v483 = vpop.f32.mrb[0].mxu0
    %v484 = vadd.f32 0.0, %v483
    %v485 = vpop.f32.mrb[0].mxu0
    %v486 = vadd.f32 0.0, %v485
    %487 = vmatprep.mubr.bf16.mxu0 0
    %488 = vmatmul.mubr.bf16.gmra.mrb[0].mxu0 %v364
    %v489 = vpop.f32.mrb[0].mxu0
    %v490 = vadd.f32 0.0, %v489
    %v491 = vpop.f32.mrb[0].mxu0
    %v492 = vadd.f32 0.0, %v491
    %v493 = vpop.f32.mrb[0].mxu0
    %v494 = vadd.f32 0.0, %v493
    %v495 = vpop.f32.mrb[0].mxu0
    %v496 = vadd.f32 0.0, %v495
    %497 = vmatprep.mubr.bf16.mxu0 0
    %498 = vmatmul.mubr.bf16.gmra.mrb[0].mxu0 %v365
    %v499 = vpop.f32.mrb[0].mxu0
    %v500 = vadd.f32 0.0, %v499
    %v501 = vpop.f32.mrb[0].mxu0
    %v502 = vadd.f32 0.0, %v501
    %v503 = vpop.f32.mrb[0].mxu0
    %v504 = vadd.f32 0.0, %v503
    %v505 = vpop.f32.mrb[0].mxu0
    %v506 = vadd.f32 0.0, %v505
    %507 = vmatprep.mubr.bf16.mxu0 0
    %508 = vmatmul.mubr.bf16.gmra.mrb[0].mxu0 %v366
    %v509 = vpop.f32.mrb[0].mxu0
    %v510 = vadd.f32 0.0, %v509
    %v511 = vpop.f32.mrb[0].mxu0
    %v512 = vadd.f32 0.0, %v511
    %v513 = vpop.f32.mrb[0].mxu0
    %v514 = vadd.f32 0.0, %v513
    %v515 = vpop.f32.mrb[0].mxu0
    %v516 = vadd.f32 0.0, %v515
    %517 = vmatprep.mubr.bf16.mxu0 0
    %518 = vmatmul.mubr.bf16.gmra.mrb[0].mxu0 %v367
    %v519 = vpop.f32.mrb[0].mxu0
    %v520 = vadd.f32 0.0, %v519
    %v521 = vpop.f32.mrb[0].mxu0
    %v522 = vadd.f32 0.0, %v521
    %v523 = vpop.f32.mrb[0].mxu0
    %v524 = vadd.f32 0.0, %v523
    %v525 = vpop.f32.mrb[0].mxu0
    %v526 = vadd.f32 0.0, %v525
    %527 = vmatprep.mubr.bf16.mxu0 0
    %528 = vmatmul.mubr.bf16.gmra.mrb[0].mxu0 %v368
    %v529 = vpop.f32.mrb[0].mxu0
    %v530 = vadd.f32 0.0, %v529
    %v531 = vpop.f32.mrb[0].mxu0
    %v532 = vadd.f32 0.0, %v531
    %v533 = vpop.f32.mrb[0].mxu0
    %v534 = vadd.f32 0.0, %v533
    %v535 = vpop.f32.mrb[0].mxu0
    %v536 = vadd.f32 0.0, %v535
    %537 = vmatprep.mubr.bf16.mxu0 0
    %538 = vmatmul.mubr.bf16.gmra.mrb[0].mxu0 %v369
    %v539 = vpop.f32.mrb[0].mxu0
    %v540 = vadd.f32 0.0, %v539
    %v541 = vpop.f32.mrb[0].mxu0
    %v542 = vadd.f32 0.0, %v541
    %v543 = vpop.f32.mrb[0].mxu0
    %v544 = vadd.f32 0.0, %v543
    %v545 = vpop.f32.mrb[0].mxu0
    %v546 = vadd.f32 0.0, %v545
    %547 = vmatprep.mubr.bf16.mxu0 0
    %548 = vmatmul.mubr.bf16.gmra.mrb[0].mxu0 %v370
    %v549 = vpop.f32.mrb[0].mxu0
    %v550 = vadd.f32 0.0, %v549
    %v551 = vpop.f32.mrb[0].mxu0
    %v552 = vadd.f32 0.0, %v551
    %v553 = vpop.f32.mrb[0].mxu0
    %v554 = vadd.f32 0.0, %v553
    %v555 = vpop.f32.mrb[0].mxu0
    %v556 = vadd.f32 0.0, %v555
    %557 = vmatprep.mubr.bf16.mxu0 0
    %558 = vmatmul.mubr.bf16.gmra.mrb[0].mxu0 %v371
    %v559 = vpop.f32.mrb[0].mxu0
    %v560 = vadd.f32 0.0, %v559
    %v561 = vpop.f32.mrb[0].mxu0
    %v562 = vadd.f32 0.0, %v561
    %v563 = vpop.f32.mrb[0].mxu0
    %v564 = vadd.f32 0.0, %v563
    %v565 = vpop.f32.mrb[0].mxu0
    %v566 = vadd.f32 0.0, %v565
    %567 = vmatprep.mubr.bf16.mxu0 0
    %568 = vmatmul.mubr.bf16.gmra.mrb[0].mxu0 %v372
    %v569 = vpop.f32.mrb[0].mxu0
    %v570 = vadd.f32 0.0, %v569
    %v571 = vpop.f32.mrb[0].mxu0
    %v572 = vadd.f32 0.0, %v571
    %v573 = vpop.f32.mrb[0].mxu0
    %v574 = vadd.f32 0.0, %v573
    %v575 = vpop.f32.mrb[0].mxu0
    %v576 = vadd.f32 0.0, %v575
    %577 = vmatprep.mubr.bf16.mxu0 0
    %578 = vmatmul.mubr.bf16.gmra.mrb[0].mxu0 %v373
    %v579 = vpop.f32.mrb[0].mxu0
    %v580 = vadd.f32 0.0, %v579
    %v581 = vpop.f32.mrb[0].mxu0
    %v582 = vadd.f32 0.0, %v581
    %v583 = vpop.f32.mrb[0].mxu0
    %v584 = vadd.f32 0.0, %v583
    %v585 = vpop.f32.mrb[0].mxu0
    %v586 = vadd.f32 0.0, %v585
    %587 = vmatprep.mubr.bf16.mxu0 0
    %588 = vmatmul.mubr.bf16.gmra.mrb[0].mxu0 %v374
    %v589 = vpop.f32.mrb[0].mxu0
    %v590 = vadd.f32 0.0, %v589
    %v591 = vpop.f32.mrb[0].mxu0
    %v592 = vadd.f32 0.0, %v591
    %v593 = vpop.f32.mrb[0].mxu0
    %v594 = vadd.f32 0.0, %v593
    %v595 = vpop.f32.mrb[0].mxu0
    %v596 = vadd.f32 0.0, %v595
    %597 = vmatprep.mubr.bf16.mxu0 0
    %598 = vmatmul.mubr.bf16.gmra.mrb[0].mxu0 %v375
    %v599 = vpop.f32.mrb[0].mxu0
    %v600 = vadd.f32 0.0, %v599
    %v601 = vpop.f32.mrb[0].mxu0
    %v602 = vadd.f32 0.0, %v601
    %v603 = vpop.f32.mrb[0].mxu0
    %v604 = vadd.f32 0.0, %v603
    %v605 = vpop.f32.mrb[0].mxu0
    %v606 = vadd.f32 0.0, %v605
    %607 = vmatprep.mubr.bf16.mxu0 0
    %608 = vmatmul.mubr.bf16.gmra.mrb[0].mxu0 %v376
    %v609 = vpop.f32.mrb[0].mxu0
    %v610 = vadd.f32 0.0, %v609
    %v611 = vpop.f32.mrb[0].mxu0
    %v612 = vadd.f32 0.0, %v611
    %v613 = vpop.f32.mrb[0].mxu0
    %v614 = vadd.f32 0.0, %v613
    %v615 = vpop.f32.mrb[0].mxu0
    %v616 = vadd.f32 0.0, %v615
    %617 = vmatprep.mubr.bf16.mxu0 0
    %618 = vmatmul.mubr.bf16.gmra.mrb[0].mxu0 %v377
    %v619 = vpop.f32.mrb[0].mxu0
    %v620 = vadd.f32 0.0, %v619
    %v621 = vpop.f32.mrb[0].mxu0
    %v622 = vadd.f32 0.0, %v621
    %v623 = vpop.f32.mrb[0].mxu0
    %v624 = vadd.f32 0.0, %v623
    %v625 = vpop.f32.mrb[0].mxu0
    %v626 = vadd.f32 0.0, %v625
    %627 = vmatprep.mubr.bf16.mxu0 0
    %628 = vmatmul.mubr.bf16.gmra.mrb[0].mxu0 %v378
    %v629 = vpop.f32.mrb[0].mxu0
    %v630 = vadd.f32 0.0, %v629
    %v631 = vpop.f32.mrb[0].mxu0
    %v632 = vadd.f32 0.0, %v631
    %v633 = vpop.f32.mrb[0].mxu0
    %v634 = vadd.f32 0.0, %v633
    %v635 = vpop.f32.mrb[0].mxu0
    %v636 = vadd.f32 0.0, %v635
    %637 = vmatprep.mubr.bf16.mxu0 0
    %638 = vmatmul.mubr.bf16.gmra.mrb[0].mxu0 %v379
    %v639 = vpop.f32.mrb[0].mxu0
    %v640 = vadd.f32 0.0, %v639
    %v641 = vpop.f32.mrb[0].mxu0
    %v642 = vadd.f32 0.0, %v641
    %v643 = vpop.f32.mrb[0].mxu0
    %v644 = vadd.f32 0.0, %v643
    %v645 = vpop.f32.mrb[0].mxu0
    %v646 = vadd.f32 0.0, %v645
    %647 = vmatprep.mubr.bf16.mxu0 0
    %648 = vmatmul.mubr.bf16.gmra.mrb[0].mxu0 %v380
    %v649 = vpop.f32.mrb[0].mxu0
    %v650 = vadd.f32 0.0, %v649
    %v651 = vpop.f32.mrb[0].mxu0
    %v652 = vadd.f32 0.0, %v651
    %v653 = vpop.f32.mrb[0].mxu0
    %v654 = vadd.f32 0.0, %v653
    %v655 = vpop.f32.mrb[0].mxu0
    %v656 = vadd.f32 0.0, %v655
    %657 = vmatprep.mubr.bf16.mxu0 0
    %658 = vmatmul.mubr.bf16.gmra.mrb[0].mxu0 %v381
    %v659 = vpop.f32.mrb[0].mxu0
    %v660 = vadd.f32 0.0, %v659
    %v661 = vpop.f32.mrb[0].mxu0
    %v662 = vadd.f32 0.0, %v661
    %v663 = vpop.f32.mrb[0].mxu0
    %v664 = vadd.f32 0.0, %v663
    %v665 = vpop.f32.mrb[0].mxu0
    %v666 = vadd.f32 0.0, %v665
    %667 = vmatprep.mubr.bf16.mxu0 0
    %668 = vmatmul.mubr.bf16.gmra.mrb[0].mxu0 %v382
    %v669 = vpop.f32.mrb[0].mxu0
    %v670 = vadd.f32 0.0, %v669
    %v671 = vpop.f32.mrb[0].mxu0
    %v672 = vadd.f32 0.0, %v671
    %v673 = vpop.f32.mrb[0].mxu0
    %v674 = vadd.f32 0.0, %v673
    %v675 = vpop.f32.mrb[0].mxu0
    %v676 = vadd.f32 0.0, %v675
    %677 = vmatprep.mubr.bf16.mxu0 0
    %678 = vmatmul.mubr.bf16.gmra.mrb[0].mxu0 %v383
    %v679 = vpop.f32.mrb[0].mxu0
    %v680 = vadd.f32 0.0, %v679
    %v681 = vpop.f32.mrb[0].mxu0
    %v682 = vadd.f32 0.0, %v681
    %v683 = vpop.f32.mrb[0].mxu0
    %v684 = vadd.f32 0.0, %v683
    %v685 = vpop.f32.mrb[0].mxu0
    %v686 = vadd.f32 0.0, %v685
    %687 = vmatprep.mubr.bf16.mxu0 0
    %688 = vmatmul.mubr.bf16.gmra.mrb[0].mxu0 %v384
    %v689 = vpop.f32.mrb[0].mxu0
    %v690 = vadd.f32 0.0, %v689
    %v691 = vpop.f32.mrb[0].mxu0
    %v692 = vadd.f32 0.0, %v691
    %v693 = vpop.f32.mrb[0].mxu0
    %v694 = vadd.f32 0.0, %v693
    %v695 = vpop.f32.mrb[0].mxu0
    %v696 = vadd.f32 0.0, %v695
    %697 = vmatprep.mubr.bf16.mxu0 0
    %698 = vmatmul.mubr.bf16.gmra.mrb[0].mxu0 %v385
    %v699 = vpop.f32.mrb[0].mxu0
    %v700 = vadd.f32 0.0, %v699
    %v701 = vpop.f32.mrb[0].mxu0
    %v702 = vadd.f32 0.0, %v701
    %v703 = vpop.f32.mrb[0].mxu0
    %v704 = vadd.f32 0.0, %v703
    %v705 = vpop.f32.mrb[0].mxu0
    %v706 = vadd.f32 0.0, %v705
    %707 = vmatprep.mubr.bf16.mxu0 0
    %708 = vmatmul.mubr.bf16.gmra.mrb[0].mxu0 %v386
    %v709 = vpop.f32.mrb[0].mxu0
    %v710 = vadd.f32 0.0, %v709
    %v711 = vpop.f32.mrb[0].mxu0
    %v712 = vadd.f32 0.0, %v711
    %v713 = vpop.f32.mrb[0].mxu0
    %v714 = vadd.f32 0.0, %v713
    %v715 = vpop.f32.mrb[0].mxu0
    %v716 = vadd.f32 0.0, %v715
    %717 = vmatprep.mubr.bf16.mxu0 0
    %718 = vmatmul.mubr.bf16.gmra.mrb[0].mxu0 %v387
    %v719 = vpop.f32.mrb[0].mxu0
    %v720 = vadd.f32 0.0, %v719
    %v721 = vpop.f32.mrb[0].mxu0
    %v722 = vadd.f32 0.0, %v721
    %v723 = vpop.f32.mrb[0].mxu0
    %v724 = vadd.f32 0.0, %v723
    %v725 = vpop.f32.mrb[0].mxu0
    %v726 = vadd.f32 0.0, %v725
    %727 = vmatprep.mubr.bf16.mxu0 0
    %728 = vmatmul.mubr.bf16.gmra.mrb[0].mxu0 %v388
    %v729 = vpop.f32.mrb[0].mxu0
    %v730 = vadd.f32 0.0, %v729
    %v731 = vpop.f32.mrb[0].mxu0
    %v732 = vadd.f32 0.0, %v731
    %v733 = vpop.f32.mrb[0].mxu0
    %v734 = vadd.f32 0.0, %v733
    %v735 = vpop.f32.mrb[0].mxu0
    %v736 = vadd.f32 0.0, %v735
    %737 = vmatprep.mubr.bf16.mxu0 0
    %738 = vmatmul.mubr.bf16.gmra.mrb[0].mxu0 %v389
    %v739 = vpop.f32.mrb[0].mxu0
    %v740 = vadd.f32 0.0, %v739
    %v741 = vpop.f32.mrb[0].mxu0
    %v742 = vadd.f32 0.0, %v741
    %v743 = vpop.f32.mrb[0].mxu0
    %v744 = vadd.f32 0.0, %v743
    %v745 = vpop.f32.mrb[0].mxu0
    %v746 = vadd.f32 0.0, %v745
    %747 = vmatprep.mubr.bf16.mxu0 0
    %748 = vmatmul.mubr.bf16.gmra.mrb[0].mxu0 %v390
    %v749 = vpop.f32.mrb[0].mxu0
    %v750 = vadd.f32 0.0, %v749
    %v751 = vpop.f32.mrb[0].mxu0
    %v752 = vadd.f32 0.0, %v751
    %v753 = vpop.f32.mrb[0].mxu0
    %v754 = vadd.f32 0.0, %v753
    %v755 = vpop.f32.mrb[0].mxu0
    %v756 = vadd.f32 0.0, %v755
    %757 = vmatprep.mubr.bf16.mxu0 0
    %758 = vmatmul.mubr.bf16.gmra.mrb[0].mxu0 %v391
    %v759 = vpop.f32.mrb[0].mxu0
    %v760 = vadd.f32 0.0, %v759
    %v761 = vpop.f32.mrb[0].mxu0
    %v762 = vadd.f32 0.0, %v761
    %v763 = vpop.f32.mrb[0].mxu0
    %v764 = vadd.f32 0.0, %v763
    %v765 = vpop.f32.mrb[0].mxu0
    %v766 = vadd.f32 0.0, %v765
    %767 = vmatprep.mubr.bf16.mxu0 0
    %768 = vmatmul.mubr.bf16.gmra.mrb[0].mxu0 %v392
    %v769 = vpop.f32.mrb[0].mxu0
    %v770 = vadd.f32 0.0, %v769
    %v771 = vpop.f32.mrb[0].mxu0
    %v772 = vadd.f32 0.0, %v771
    %v773 = vpop.f32.mrb[0].mxu0
    %v774 = vadd.f32 0.0, %v773
    %v775 = vpop.f32.mrb[0].mxu0
    %v776 = vadd.f32 0.0, %v775
    %777 = vdwg.mxu0
    %778 = vst [vmem:[#allocation8] sm:$0xff] %v460
    %779 = vst [vmem:[#allocation8 + $0x8] sm:$0xff] %v462
    %780 = vst [vmem:[#allocation8 + $0x10] sm:$0xff] %v464
    %781 = vst [vmem:[#allocation8 + $0x18] sm:$0xff] %v466
    %782 = vst [vmem:[#allocation8 + $0x20] sm:$0xff] %v470
    %783 = vst [vmem:[#allocation8 + $0x28] sm:$0xff] %v472
    %784 = vst [vmem:[#allocation8 + $0x30] sm:$0xff] %v474
    %785 = vst [vmem:[#allocation8 + $0x38] sm:$0xff] %v476
    %786 = vst [vmem:[#allocation8 + $0x40] sm:$0xff] %v480
    %787 = vst [vmem:[#allocation8 + $0x48] sm:$0xff] %v482
    %788 = vst [vmem:[#allocation8 + $0x50] sm:$0xff] %v484
    %789 = vst [vmem:[#allocation8 + $0x58] sm:$0xff] %v486
    %790 = vst [vmem:[#allocation8 + $0x60] sm:$0xff] %v490
    %791 = vst [vmem:[#allocation8 + $0x68] sm:$0xff] %v492
    %792 = vst [vmem:[#allocation8 + $0x70] sm:$0xff] %v494
    %793 = vst [vmem:[#allocation8 + $0x78] sm:$0xff] %v496
    %794 = vst [vmem:[#allocation8 + $0x80] sm:$0xff] %v500
    %795 = vst [vmem:[#allocation8 + $0x88] sm:$0xff] %v502
    %796 = vst [vmem:[#allocation8 + $0x90] sm:$0xff] %v504
    %797 = vst [vmem:[#allocation8 + $0x98] sm:$0xff] %v506
    %798 = vst [vmem:[#allocation8 + $0xa0] sm:$0xff] %v510
    %799 = vst [vmem:[#allocation8 + $0xa8] sm:$0xff] %v512
    %800 = vst [vmem:[#allocation8 + $0xb0] sm:$0xff] %v514
    %801 = vst [vmem:[#allocation8 + $0xb8] sm:$0xff] %v516
    %802 = vst [vmem:[#allocation8 + $0xc0] sm:$0xff] %v520
    %803 = vst [vmem:[#allocation8 + $0xc8] sm:$0xff] %v522
    %804 = vst [vmem:[#allocation8 + $0xd0] sm:$0xff] %v524
    %805 = vst [vmem:[#allocation8 + $0xd8] sm:$0xff] %v526
    %806 = vst [vmem:[#allocation8 + $0xe0] sm:$0xff] %v530
    %807 = vst [vmem:[#allocation8 + $0xe8] sm:$0xff] %v532
    %808 = vst [vmem:[#allocation8 + $0xf0] sm:$0xff] %v534
    %809 = vst [vmem:[#allocation8 + $0xf8] sm:$0xff] %v536
    %810 = vst [vmem:[#allocation8 + $0x100] sm:$0xff] %v540
    %811 = vst [vmem:[#allocation8 + $0x108] sm:$0xff] %v542
    %812 = vst [vmem:[#allocation8 + $0x110] sm:$0xff] %v544
    %813 = vst [vmem:[#allocation8 + $0x118] sm:$0xff] %v546
    %814 = vst [vmem:[#allocation8 + $0x120] sm:$0xff] %v550
    %815 = vst [vmem:[#allocation8 + $0x128] sm:$0xff] %v552
    %816 = vst [vmem:[#allocation8 + $0x130] sm:$0xff] %v554
    %817 = vst [vmem:[#allocation8 + $0x138] sm:$0xff] %v556
    %818 = vst [vmem:[#allocation8 + $0x140] sm:$0xff] %v560
    %819 = vst [vmem:[#allocation8 + $0x148] sm:$0xff] %v562
    %820 = vst [vmem:[#allocation8 + $0x150] sm:$0xff] %v564
    %821 = vst [vmem:[#allocation8 + $0x158] sm:$0xff] %v566
    %822 = vst [vmem:[#allocation8 + $0x160] sm:$0xff] %v570
    %823 = vst [vmem:[#allocation8 + $0x168] sm:$0xff] %v572
    %824 = vst [vmem:[#allocation8 + $0x170] sm:$0xff] %v574
    %825 = vst [vmem:[#allocation8 + $0x178] sm:$0xff] %v576
    %826 = vst [vmem:[#allocation8 + $0x180] sm:$0xff] %v580
    %827 = vst [vmem:[#allocation8 + $0x188] sm:$0xff] %v582
    %828 = vst [vmem:[#allocation8 + $0x190] sm:$0xff] %v584
    %829 = vst [vmem:[#allocation8 + $0x198] sm:$0xff] %v586
    %830 = vst [vmem:[#allocation8 + $0x1a0] sm:$0xff] %v590
    %831 = vst [vmem:[#allocation8 + $0x1a8] sm:$0xff] %v592
    %832 = vst [vmem:[#allocation8 + $0x1b0] sm:$0xff] %v594
    %833 = vst [vmem:[#allocation8 + $0x1b8] sm:$0xff] %v596
    %834 = vst [vmem:[#allocation8 + $0x1c0] sm:$0xff] %v600
    %835 = vst [vmem:[#allocation8 + $0x1c8] sm:$0xff] %v602
    %836 = vst [vmem:[#allocation8 + $0x1d0] sm:$0xff] %v604
    %837 = vst [vmem:[#allocation8 + $0x1d8] sm:$0xff] %v606
    %838 = vst [vmem:[#allocation8 + $0x1e0] sm:$0xff] %v610
    %839 = vst [vmem:[#allocation8 + $0x1e8] sm:$0xff] %v612
    %840 = vst [vmem:[#allocation8 + $0x1f0] sm:$0xff] %v614
    %841 = vst [vmem:[#allocation8 + $0x1f8] sm:$0xff] %v616
    %842 = vst [vmem:[#allocation8 + $0x200] sm:$0xff] %v620
    %843 = vst [vmem:[#allocation8 + $0x208] sm:$0xff] %v622
    %844 = vst [vmem:[#allocation8 + $0x210] sm:$0xff] %v624
    %845 = vst [vmem:[#allocation8 + $0x218] sm:$0xff] %v626
    %846 = vst [vmem:[#allocation8 + $0x220] sm:$0xff] %v630
    %847 = vst [vmem:[#allocation8 + $0x228] sm:$0xff] %v632
    %848 = vst [vmem:[#allocation8 + $0x230] sm:$0xff] %v634
    %849 = vst [vmem:[#allocation8 + $0x238] sm:$0xff] %v636
    %850 = vst [vmem:[#allocation8 + $0x240] sm:$0xff] %v640
    %851 = vst [vmem:[#allocation8 + $0x248] sm:$0xff] %v642
    %852 = vst [vmem:[#allocation8 + $0x250] sm:$0xff] %v644
    %853 = vst [vmem:[#allocation8 + $0x258] sm:$0xff] %v646
    %854 = vst [vmem:[#allocation8 + $0x260] sm:$0xff] %v650
    %855 = vst [vmem:[#allocation8 + $0x268] sm:$0xff] %v652
    %856 = vst [vmem:[#allocation8 + $0x270] sm:$0xff] %v654
    %857 = vst [vmem:[#allocation8 + $0x278] sm:$0xff] %v656
    %858 = vst [vmem:[#allocation8 + $0x280] sm:$0xff] %v660
    %859 = vst [vmem:[#allocation8 + $0x288] sm:$0xff] %v662
    %860 = vst [vmem:[#allocation8 + $0x290] sm:$0xff] %v664
    %861 = vst [vmem:[#allocation8 + $0x298] sm:$0xff] %v666
    %862 = vst [vmem:[#allocation8 + $0x2a0] sm:$0xff] %v670
    %863 = vst [vmem:[#allocation8 + $0x2a8] sm:$0xff] %v672
    %864 = vst [vmem:[#allocation8 + $0x2b0] sm:$0xff] %v674
    %865 = vst [vmem:[#allocation8 + $0x2b8] sm:$0xff] %v676
    %866 = vst [vmem:[#allocation8 + $0x2c0] sm:$0xff] %v680
    %867 = vst [vmem:[#allocation8 + $0x2c8] sm:$0xff] %v682
    %868 = vst [vmem:[#allocation8 + $0x2d0] sm:$0xff] %v684
    %869 = vst [vmem:[#allocation8 + $0x2d8] sm:$0xff] %v686
    %870 = vst [vmem:[#allocation8 + $0x2e0] sm:$0xff] %v690
    %871 = vst [vmem:[#allocation8 + $0x2e8] sm:$0xff] %v692
    %872 = vst [vmem:[#allocation8 + $0x2f0] sm:$0xff] %v694
    %873 = vst [vmem:[#allocation8 + $0x2f8] sm:$0xff] %v696
    %874 = vst [vmem:[#allocation8 + $0x300] sm:$0xff] %v700
    %875 = vst [vmem:[#allocation8 + $0x308] sm:$0xff] %v702
    %876 = vst [vmem:[#allocation8 + $0x310] sm:$0xff] %v704
    %877 = vst [vmem:[#allocation8 + $0x318] sm:$0xff] %v706
    %878 = vst [vmem:[#allocation8 + $0x320] sm:$0xff] %v710
    %879 = vst [vmem:[#allocation8 + $0x328] sm:$0xff] %v712
    %880 = vst [vmem:[#allocation8 + $0x330] sm:$0xff] %v714
    %881 = vst [vmem:[#allocation8 + $0x338] sm:$0xff] %v716
    %882 = vst [vmem:[#allocation8 + $0x340] sm:$0xff] %v720
    %883 = vst [vmem:[#allocation8 + $0x348] sm:$0xff] %v722
    %884 = vst [vmem:[#allocation8 + $0x350] sm:$0xff] %v724
    %885 = vst [vmem:[#allocation8 + $0x358] sm:$0xff] %v726
    %886 = vst [vmem:[#allocation8 + $0x360] sm:$0xff] %v730
    %887 = vst [vmem:[#allocation8 + $0x368] sm:$0xff] %v732
    %888 = vst [vmem:[#allocation8 + $0x370] sm:$0xff] %v734
    %889 = vst [vmem:[#allocation8 + $0x378] sm:$0xff] %v736
    %890 = vst [vmem:[#allocation8 + $0x380] sm:$0xff] %v740
    %891 = vst [vmem:[#allocation8 + $0x388] sm:$0xff] %v742
    %892 = vst [vmem:[#allocation8 + $0x390] sm:$0xff] %v744
    %893 = vst [vmem:[#allocation8 + $0x398] sm:$0xff] %v746
    %894 = vst [vmem:[#allocation8 + $0x3a0] sm:$0xff] %v750
    %895 = vst [vmem:[#allocation8 + $0x3a8] sm:$0xff] %v752
    %896 = vst [vmem:[#allocation8 + $0x3b0] sm:$0xff] %v754
    %897 = vst [vmem:[#allocation8 + $0x3b8] sm:$0xff] %v756
    %898 = vst [vmem:[#allocation8 + $0x3c0] sm:$0xff] %v760
    %899 = vst [vmem:[#allocation8 + $0x3c8] sm:$0xff] %v762
    %900 = vst [vmem:[#allocation8 + $0x3d0] sm:$0xff] %v764
    %901 = vst [vmem:[#allocation8 + $0x3d8] sm:$0xff] %v766
    %902 = vst [vmem:[#allocation8 + $0x3e0] sm:$0xff] %v770
    %903 = vst [vmem:[#allocation8 + $0x3e8] sm:$0xff] %v772
    %904 = vst [vmem:[#allocation8 + $0x3f0] sm:$0xff] %v774
    %905 = vst [vmem:[#allocation8 + $0x3f8] sm:$0xff] %v776
    // Predicated region
    $region26: #{tpu_custom_call.1} parent=1 // pred_check
      _
    $region27: #{tpu_custom_call.1} parent=1 // pred_check_branch
      %907 = sbr.rel (0) target = $region29
    $region28: #{tpu_custom_call.1} parent=1 // pred_region
      %s909 = ssub.s32 16384, 16384
      %910 = vsyncadd [#allocation4], %s909
      %s911 = sshll.u32 [#allocation8], 4
      %s912 = int_to_ptr.vmem [resolvable:$true] %s911
      %917 = dma.vmem_to_hbm [thread:$0]  %s912, 16384, %s3, [#allocation4], 256, 256, 16
    $region29: #{tpu_custom_call.1} parent=1 // pred_fallthru
      _
    // Predicated region
    $region30: #{tpu_custom_call.1} parent=1 // pred_check
      _
    $region31: #{tpu_custom_call.1} parent=1 // pred_check_branch
      %919 = sbr.rel (0) target = $region33
    $region32: #{tpu_custom_call.1} parent=1 // pred_region
      %920 = dma.done [#allocation4], 16384
    $region33: #{tpu_custom_call.1} parent=1 // pred_fallthru
      _
    %921 = vsyncpa [#allocation3], 1
    %922 = vsyncpa [#allocation6], 1
    %923 = vsyncpa [#allocation4], 1

</llo_original>
